<compile_context>
chip_gen: v7x
topology: tpu7x:2x2x1
jax: 0.10.0
libtpu: 0.0.40
codegen_flags: <defaults>
</compile_context>

<pallas_src>
import functools

import jax
import jax.numpy as jnp
from jax.experimental import pallas as pl
from jax.experimental.pallas import tpu as pltpu


def _round_up(x, m):
    return (x + m - 1) // m * m


def actor_kernel(scale_ref, x_ref, w1_ref, b1_ref, w2_ref, b2_ref,
                 w3_ref, b3_ref, out_ref):
    # state[2] = state[2] / 8  -> per-global-row scale column (1.0 everywhere,
    # 0.125 at global batch row 2), built in the wrapper so batch tiling is safe.
    x = x_ref[...] * scale_ref[...]

    # fc1 + ReLU
    h1 = jnp.dot(x, w1_ref[...], preferred_element_type=jnp.float32) + b1_ref[...]
    h1 = jnp.maximum(h1, 0.0)

    # fc2 + ReLU
    h2 = jnp.dot(h1, w2_ref[...], preferred_element_type=jnp.float32) + b2_ref[...]
    h2 = jnp.maximum(h2, 0.0)

    # fc3 + tanh (w3 is padded to 128 output lanes -> lane-dense MXU matmul + store)
    h3 = jnp.dot(h2, w3_ref[...], preferred_element_type=jnp.float32) + b3_ref[...]
    out_ref[...] = jnp.tanh(h3)


@functools.partial(jax.jit, static_argnames=("block_b",))
def actor_forward(state, params, block_b=128):
    """state: (B, state_size) f32. params: dict of transposed weights + biases."""
    B, S = state.shape
    H1 = params["w1"].shape[1]
    H2 = params["w2"].shape[1]
    A = params["w3"].shape[1]

    # (8,128)-aligned padded dims.
    S_p = _round_up(S, 128)
    H1_p = _round_up(H1, 128)
    H2_p = _round_up(H2, 128)
    A_p = _round_up(A, 128)
    TB = min(block_b, _round_up(B, 8))     # batch block (sublane-aligned)
    B_p = _round_up(B, TB)

    # Zero-padding: padded input columns / weight rows are zero, padded bias lanes
    # are zero, so valid rows/cols of the result are bit-identical in exact math.
    x = jnp.zeros((B_p, S_p), jnp.float32).at[:B, :S].set(state)
    w1 = jnp.zeros((S_p, H1_p), jnp.float32).at[:S, :H1].set(params["w1"])
    b1 = jnp.zeros((1, H1_p), jnp.float32).at[:, :H1].set(params["b1"])
    w2 = jnp.zeros((H1_p, H2_p), jnp.float32).at[:H1, :H2].set(params["w2"])
    b2 = jnp.zeros((1, H2_p), jnp.float32).at[:, :H2].set(params["b2"])
    w3 = jnp.zeros((H2_p, A_p), jnp.float32).at[:H2, :A].set(params["w3"])
    b3 = jnp.zeros((1, A_p), jnp.float32).at[:, :A].set(params["b3"])

    # Faithful to the PyTorch code: scales global batch row 2 (not feature column 2).
    scale = jnp.ones((B_p, 1), jnp.float32).at[2, 0].set(0.125)

    grid = (B_p // TB,)
    batch_spec = lambda shape: pl.BlockSpec(shape, lambda i: (i, 0))
    resident_spec = lambda shape: pl.BlockSpec(shape, lambda i: (0, 0))

    out = pl.pallas_call(
        actor_kernel,
        out_shape=jax.ShapeDtypeStruct((B_p, A_p), jnp.float32),
        grid=grid,
        in_specs=[
            batch_spec((TB, 1)),          # per-row scale column
            batch_spec((TB, S_p)),        # state block
            resident_spec((S_p, H1_p)),   # w1
            resident_spec((1, H1_p)),     # b1
            resident_spec((H1_p, H2_p)),  # w2
            resident_spec((1, H2_p)),     # b2
            resident_spec((H2_p, A_p)),   # w3
            resident_spec((1, A_p)),      # b3
        ],
        out_specs=batch_spec((TB, A_p)),
        compiler_params=pltpu.CompilerParams(
            dimension_semantics=("parallel",)),
    )(scale, x, w1, b1, w2, b2, w3, b3)

    return out[:B, :A]


def init_actor_params(key, state_size, action_size, fc1_units, fc2_units):
    """Deterministic init matching the PyTorch shapes / reset_parameters bounds.
    Weights are stored as (in, out) = PyTorch weight.T."""
    k1, k2, k3, kb1, kb2, kb3 = jax.random.split(key, 6)

    # fc1.weight ~ U(-1/sqrt(fan_in), 1/sqrt(fan_in)); fan_in = weight.size(0) = fc1_units
    lim1 = 1.0 / jnp.sqrt(jnp.float32(fc1_units))
    w1 = jax.random.uniform(k1, (state_size, fc1_units), jnp.float32, -lim1, lim1)
    # fc2.weight ~ U(-0.0015, 0.0015)
    w2 = jax.random.uniform(k2, (fc1_units, fc2_units), jnp.float32, -0.0015, 0.0015)
    # fc3.weight ~ U(-0.003, 0.003)
    w3 = jax.random.uniform(k3, (fc2_units, action_size), jnp.float32, -0.003, 0.003)

    # biases keep nn.Linear default init: U(-1/sqrt(in_features), 1/sqrt(in_features))
    lb1 = 1.0 / jnp.sqrt(jnp.float32(state_size))
    lb2 = 1.0 / jnp.sqrt(jnp.float32(fc1_units))
    lb3 = 1.0 / jnp.sqrt(jnp.float32(fc2_units))
    b1 = jax.random.uniform(kb1, (1, fc1_units), jnp.float32, -lb1, lb1)
    b2 = jax.random.uniform(kb2, (1, fc2_units), jnp.float32, -lb2, lb2)
    b3 = jax.random.uniform(kb3, (1, action_size), jnp.float32, -lb3, lb3)

    return {"w1": w1, "b1": b1, "w2": w2, "b2": b2, "w3": w3, "b3": b3}


def actor_reference(state, params):
    """Pure-JAX reference for correctness checking (same buggy row-2 semantics)."""
    x = state.at[2].set(state[2] / 8.0)
    h1 = jnp.maximum(x @ params["w1"] + params["b1"], 0.0)
    h2 = jnp.maximum(h1 @ params["w2"] + params["b2"], 0.0)
    return jnp.tanh(h2 @ params["w3"] + params["b3"])


if __name__ == "__main__":
    # Pendulum-like small sizes. Batch must be >= 3 because forward indexes state[2].
    B, state_size, action_size = 4, 3, 1
    fc1_units, fc2_units = 64, 64   # small hidden sizes (constructor parameters)

    key = jax.random.PRNGKey(0)
    k_params, k_state = jax.random.split(key)
    params = init_actor_params(k_params, state_size, action_size, fc1_units, fc2_units)
    state = jax.random.normal(k_state, (B, state_size), jnp.float32)

    out = actor_forward(state, params)
    out = jax.block_until_ready(out)

    ref = actor_reference(state, params)
    assert out.shape == (B, action_size)
    assert jnp.allclose(out, ref, atol=1e-5, rtol=1e-5), (out, ref)

    print("KERNEL_OK")
</pallas_src>

<mosaic_0001>
module attributes {stable_mosaic.version = 11 : i64} {
  func.func @actor_kernel(%arg0: i32, %arg1: memref<8x1xf32, #tpu.memory_space<vmem>>, %arg2: memref<8x128xf32, #tpu.memory_space<vmem>>, %arg3: memref<128x128xf32, #tpu.memory_space<vmem>>, %arg4: memref<1x128xf32, #tpu.memory_space<vmem>>, %arg5: memref<128x128xf32, #tpu.memory_space<vmem>>, %arg6: memref<1x128xf32, #tpu.memory_space<vmem>>, %arg7: memref<128x128xf32, #tpu.memory_space<vmem>>, %arg8: memref<1x128xf32, #tpu.memory_space<vmem>>, %arg9: memref<8x128xf32, #tpu.memory_space<vmem>>) attributes {dimension_semantics = [#tpu.dimension_semantics<parallel>], iteration_bounds = array<i64: 1>, scalar_prefetch = 0 : i64, scratch_operands = 0 : i64, tpu.core_type = #tpu.core_type<tc>, window_params = [{transform_indices = @transform_0, window_bounds = array<i64: 8, 1>}, {transform_indices = @transform_1, window_bounds = array<i64: 8, 128>}, {pipeline_mode = #tpu.pipeline_mode<synchronous>, transform_indices = @transform_2, window_bounds = array<i64: 128, 128>}, {pipeline_mode = #tpu.pipeline_mode<synchronous>, transform_indices = @transform_3, window_bounds = array<i64: 1, 128>}, {pipeline_mode = #tpu.pipeline_mode<synchronous>, transform_indices = @transform_4, window_bounds = array<i64: 128, 128>}, {pipeline_mode = #tpu.pipeline_mode<synchronous>, transform_indices = @transform_5, window_bounds = array<i64: 1, 128>}, {pipeline_mode = #tpu.pipeline_mode<synchronous>, transform_indices = @transform_6, window_bounds = array<i64: 128, 128>}, {pipeline_mode = #tpu.pipeline_mode<synchronous>, transform_indices = @transform_7, window_bounds = array<i64: 1, 128>}, {transform_indices = @transform_8, window_bounds = array<i64: 8, 128>}]} {
    %c0 = arith.constant 0 : index
    %c0_0 = arith.constant 0 : index
    %0 = vector.load %arg2[%c0, %c0_0] : memref<8x128xf32, #tpu.memory_space<vmem>>, vector<8x128xf32>
    %c0_1 = arith.constant 0 : index
    %c0_2 = arith.constant 0 : index
    %1 = vector.load %arg1[%c0_1, %c0_2] : memref<8x1xf32, #tpu.memory_space<vmem>>, vector<8x1xf32>
    %2 = vector.broadcast %1 : vector<8x1xf32> to vector<8x128xf32>
    %3 = arith.mulf %0, %2 : vector<8x128xf32>
    %c0_3 = arith.constant 0 : index
    %c0_4 = arith.constant 0 : index
    %4 = vector.load %arg3[%c0_3, %c0_4] : memref<128x128xf32, #tpu.memory_space<vmem>>, vector<128x128xf32>
    %cst = arith.constant dense<0.000000e+00> : vector<8x128xf32>
    %5 = tpu.matmul %3, %4, %cst {dimension_numbers = #tpu.dot_dimension_numbers<[1], [0], [0], [1], [0, 0, 1, 1], [], []>} : vector<8x128xf32>, vector<128x128xf32>, vector<8x128xf32> -> vector<8x128xf32>
    %c0_5 = arith.constant 0 : index
    %c0_6 = arith.constant 0 : index
    %6 = vector.load %arg4[%c0_5, %c0_6] : memref<1x128xf32, #tpu.memory_space<vmem>>, vector<1x128xf32>
    %7 = vector.broadcast %6 : vector<1x128xf32> to vector<8x128xf32>
    %8 = arith.addf %5, %7 : vector<8x128xf32>
    %cst_7 = arith.constant 0.000000e+00 : f32
    %9 = vector.broadcast %cst_7 : f32 to vector<8x128xf32>
    %10 = arith.maximumf %8, %9 : vector<8x128xf32>
    %c0_8 = arith.constant 0 : index
    %c0_9 = arith.constant 0 : index
    %11 = vector.load %arg5[%c0_8, %c0_9] : memref<128x128xf32, #tpu.memory_space<vmem>>, vector<128x128xf32>
    %cst_10 = arith.constant dense<0.000000e+00> : vector<8x128xf32>
    %12 = tpu.matmul %10, %11, %cst_10 {dimension_numbers = #tpu.dot_dimension_numbers<[1], [0], [0], [1], [0, 0, 1, 1], [], []>} : vector<8x128xf32>, vector<128x128xf32>, vector<8x128xf32> -> vector<8x128xf32>
    %c0_11 = arith.constant 0 : index
    %c0_12 = arith.constant 0 : index
    %13 = vector.load %arg6[%c0_11, %c0_12] : memref<1x128xf32, #tpu.memory_space<vmem>>, vector<1x128xf32>
    %14 = vector.broadcast %13 : vector<1x128xf32> to vector<8x128xf32>
    %15 = arith.addf %12, %14 : vector<8x128xf32>
    %cst_13 = arith.constant 0.000000e+00 : f32
    %16 = vector.broadcast %cst_13 : f32 to vector<8x128xf32>
    %17 = arith.maximumf %15, %16 : vector<8x128xf32>
    %c0_14 = arith.constant 0 : index
    %c0_15 = arith.constant 0 : index
    %18 = vector.load %arg7[%c0_14, %c0_15] : memref<128x128xf32, #tpu.memory_space<vmem>>, vector<128x128xf32>
    %cst_16 = arith.constant dense<0.000000e+00> : vector<8x128xf32>
    %19 = tpu.matmul %17, %18, %cst_16 {dimension_numbers = #tpu.dot_dimension_numbers<[1], [0], [0], [1], [0, 0, 1, 1], [], []>} : vector<8x128xf32>, vector<128x128xf32>, vector<8x128xf32> -> vector<8x128xf32>
    %c0_17 = arith.constant 0 : index
    %c0_18 = arith.constant 0 : index
    %20 = vector.load %arg8[%c0_17, %c0_18] : memref<1x128xf32, #tpu.memory_space<vmem>>, vector<1x128xf32>
    %21 = vector.broadcast %20 : vector<1x128xf32> to vector<8x128xf32>
    %22 = arith.addf %19, %21 : vector<8x128xf32>
    %23 = math.tanh %22 : vector<8x128xf32>
    %c0_19 = arith.constant 0 : index
    %c0_20 = arith.constant 0 : index
    %24 = vector.load %arg9[%c0_19, %c0_20] : memref<8x128xf32, #tpu.memory_space<vmem>>, vector<8x128xf32>
    tpu.vector_store %arg9[%c0_19, %c0_20], %23 {strides = array<i32>} : memref<8x128xf32, #tpu.memory_space<vmem>>, vector<8x128xf32>,
    return
  }
  func.func @transform_0(%arg0: i32) -> (i32, i32) {
    %c0_i32 = arith.constant 0 : i32
    %c0_i32_0 = arith.constant 0 : i32
    return %arg0, %c0_i32 : i32, i32
  }
  func.func @transform_1(%arg0: i32) -> (i32, i32) {
    %c0_i32 = arith.constant 0 : i32
    %c0_i32_0 = arith.constant 0 : i32
    return %arg0, %c0_i32 : i32, i32
  }
  func.func @transform_2(%arg0: i32) -> (i32, i32) {
    %c0_i32 = arith.constant 0 : i32
    %c0_i32_0 = arith.constant 0 : i32
    %c0_i32_1 = arith.constant 0 : i32
    return %c0_i32, %c0_i32_0 : i32, i32
  }
  func.func @transform_3(%arg0: i32) -> (i32, i32) {
    %c0_i32 = arith.constant 0 : i32
    %c0_i32_0 = arith.constant 0 : i32
    %c0_i32_1 = arith.constant 0 : i32
    return %c0_i32, %c0_i32_0 : i32, i32
  }
  func.func @transform_4(%arg0: i32) -> (i32, i32) {
    %c0_i32 = arith.constant 0 : i32
    %c0_i32_0 = arith.constant 0 : i32
    %c0_i32_1 = arith.constant 0 : i32
    return %c0_i32, %c0_i32_0 : i32, i32
  }
  func.func @transform_5(%arg0: i32) -> (i32, i32) {
    %c0_i32 = arith.constant 0 : i32
    %c0_i32_0 = arith.constant 0 : i32
    %c0_i32_1 = arith.constant 0 : i32
    return %c0_i32, %c0_i32_0 : i32, i32
  }
  func.func @transform_6(%arg0: i32) -> (i32, i32) {
    %c0_i32 = arith.constant 0 : i32
    %c0_i32_0 = arith.constant 0 : i32
    %c0_i32_1 = arith.constant 0 : i32
    return %c0_i32, %c0_i32_0 : i32, i32
  }
  func.func @transform_7(%arg0: i32) -> (i32, i32) {
    %c0_i32 = arith.constant 0 : i32
    %c0_i32_0 = arith.constant 0 : i32
    %c0_i32_1 = arith.constant 0 : i32
    return %c0_i32, %c0_i32_0 : i32, i32
  }
  func.func @transform_8(%arg0: i32) -> (i32, i32) {
    %c0_i32 = arith.constant 0 : i32
    %c0_i32_0 = arith.constant 0 : i32
    return %arg0, %c0_i32 : i32, i32
  }
}

</mosaic_0001>

<llo_original>
// kernel: actor_forward.1
$region0: #{actor_forward.1}
  #allocation0 [shape = 'u32[]', space=smem, size = 0x4, offset = 0x4, fixed_abs, tag = 'smem constant byte address 0x4 - core index']
  #allocation1 [shape = 'u32[144,128]{1,0:T(1,128)}', space=vmem, size = 0x12000, scoped, tag = 'internal scratch']
  %s0 = inlined_call_operand.vmem [shape: f32[8,1], index: 0, kind: input, shape index: {}]
  %s1 = inlined_call_operand.vmem [shape: f32[8,128], index: 1, kind: input, shape index: {}]
  %s2 = inlined_call_operand.vmem [shape: f32[128,128], index: 2, kind: input, shape index: {}]
  %s3 = inlined_call_operand.vmem [shape: f32[1,128], index: 3, kind: input, shape index: {}]
  %s4 = inlined_call_operand.vmem [shape: f32[128,128], index: 4, kind: input, shape index: {}]
  %s5 = inlined_call_operand.vmem [shape: f32[1,128], index: 5, kind: input, shape index: {}]
  %s6 = inlined_call_operand.vmem [shape: f32[128,128], index: 6, kind: input, shape index: {}]
  %s7 = inlined_call_operand.vmem [shape: f32[1,128], index: 7, kind: input, shape index: {}]
  %s8 = inlined_call_operand.vmem [shape: f32[8,128], index: 8, kind: output, shape index: {}]
  %s9 = sld [smem:[#allocation0]]
  $region42: #{actor_forward.1} parent=0
    _
  %s11 = ssub.s32 1, %s9
  %s12 = scalar_select 0, %s11, %s9
  // Predicated region
  $region2: #{actor_forward.1} parent=0 // pred_check
    _
  $region3: #{actor_forward.1} parent=0 // pred_check_branch
    %14 = sbr.rel (0) target = $region5
  $region4: #{actor_forward.1} parent=0 // pred_region
    _
  $region5: #{actor_forward.1} parent=0 // pred_fallthru
    _
  // Predicated region
  $region6: #{actor_forward.1} parent=0 // pred_check
    _
  $region7: #{actor_forward.1} parent=0 // pred_check_branch
    %16 = sbr.rel (0) target = $region9
  $region8: #{actor_forward.1} parent=0 // pred_region
    _
  $region9: #{actor_forward.1} parent=0 // pred_fallthru
    _
  // Predicated region
  $region10: #{actor_forward.1} parent=0 // pred_check
    _
  $region11: #{actor_forward.1} parent=0 // pred_check_branch
    %18 = sbr.rel (0) target = $region13
  $region12: #{actor_forward.1} parent=0 // pred_region
    _
  $region13: #{actor_forward.1} parent=0 // pred_fallthru
    _
  // Predicated region
  $region14: #{actor_forward.1} parent=0 // pred_check
    _
  $region15: #{actor_forward.1} parent=0 // pred_check_branch
    %20 = sbr.rel (0) target = $region17
  $region16: #{actor_forward.1} parent=0 // pred_region
    _
  $region17: #{actor_forward.1} parent=0 // pred_fallthru
    _
  // Predicated region
  $region18: #{actor_forward.1} parent=0 // pred_check
    _
  $region19: #{actor_forward.1} parent=0 // pred_check_branch
    %22 = sbr.rel (0) target = $region21
  $region20: #{actor_forward.1} parent=0 // pred_region
    _
  $region21: #{actor_forward.1} parent=0 // pred_fallthru
    _
  // Predicated region
  $region22: #{actor_forward.1} parent=0 // pred_check
    _
  $region23: #{actor_forward.1} parent=0 // pred_check_branch
    %24 = sbr.rel (0) target = $region25
  $region24: #{actor_forward.1} parent=0 // pred_region
    _
  $region25: #{actor_forward.1} parent=0 // pred_fallthru
    _
  // Predicated region
  $region26: #{actor_forward.1} parent=0 // pred_check
    _
  $region27: #{actor_forward.1} parent=0 // pred_check_branch
    %26 = sbr.rel (0) target = $region29
  $region28: #{actor_forward.1} parent=0 // pred_region
    _
  $region29: #{actor_forward.1} parent=0 // pred_fallthru
    _
  // Predicated region
  $region30: #{actor_forward.1} parent=0 // pred_check
    _
  $region31: #{actor_forward.1} parent=0 // pred_check_branch
    %28 = sbr.rel (0) target = $region33
  $region32: #{actor_forward.1} parent=0 // pred_region
    _
  $region33: #{actor_forward.1} parent=0 // pred_fallthru
    _
  %v29 = vld [vmem:[%s1] sm:$0xff]
  %v30 = vld [vmem:[%s0] sm:$0xff]
  %32 = vset.pattern.permute.xlu0 0
  %33 = vperm.xlu0 %32, %v30
  %v34 = vpop.permute.xlu0 %33
  %v36 = vmul.f32 %v29, %v34
  %v37 = vld [vmem:[%s2] sm:$0xff]
  %v38 = vld [vmem:[%s2 + $0x8] sm:$0xff]
  %v39 = vld [vmem:[%s2 + $0x10] sm:$0xff]
  %v40 = vld [vmem:[%s2 + $0x18] sm:$0xff]
  %v41 = vld [vmem:[%s2 + $0x20] sm:$0xff]
  %v42 = vld [vmem:[%s2 + $0x28] sm:$0xff]
  %v43 = vld [vmem:[%s2 + $0x30] sm:$0xff]
  %v44 = vld [vmem:[%s2 + $0x38] sm:$0xff]
  %v45 = vld [vmem:[%s2 + $0x40] sm:$0xff]
  %v46 = vld [vmem:[%s2 + $0x48] sm:$0xff]
  %v47 = vld [vmem:[%s2 + $0x50] sm:$0xff]
  %v48 = vld [vmem:[%s2 + $0x58] sm:$0xff]
  %v49 = vld [vmem:[%s2 + $0x60] sm:$0xff]
  %v50 = vld [vmem:[%s2 + $0x68] sm:$0xff]
  %v51 = vld [vmem:[%s2 + $0x70] sm:$0xff]
  %v52 = vld [vmem:[%s2 + $0x78] sm:$0xff]
  %v53 = vld [vmem:[%s3] sm:$0x1]
  %v55 = vlaneseq
  %v56 = vshrl.u32 %v55, 7
  %v57 = vsub.s32 0, %v56
  %v58 = vrot.slane %v53, %v57
  %60 = vmatprep.subr.mxu0 0.0
  %61 = vmatpush1.msra.mxu0 %v37
  %62 = vmatprep.subr.mxu0 0.0
  %63 = vmatpush1.msra.mxu0 %v38
  %64 = vmatprep.subr.mxu0 0.0
  %65 = vmatpush1.msra.mxu0 %v39
  %66 = vmatprep.subr.mxu0 0.0
  %67 = vmatpush1.msra.mxu0 %v40
  %68 = vmatprep.subr.mxu0 0.0
  %69 = vmatpush1.msra.mxu0 %v41
  %70 = vmatprep.subr.mxu0 0.0
  %71 = vmatpush1.msra.mxu0 %v42
  %72 = vmatprep.subr.mxu0 0.0
  %73 = vmatpush1.msra.mxu0 %v43
  %74 = vmatprep.subr.mxu0 0.0
  %75 = vmatpush1.msra.mxu0 %v44
  %76 = vmatprep.subr.mxu0 0.0
  %77 = vmatpush1.msra.mxu0 %v45
  %78 = vmatprep.subr.mxu0 0.0
  %79 = vmatpush1.msra.mxu0 %v46
  %80 = vmatprep.subr.mxu0 0.0
  %81 = vmatpush1.msra.mxu0 %v47
  %82 = vmatprep.subr.mxu0 0.0
  %83 = vmatpush1.msra.mxu0 %v48
  %84 = vmatprep.subr.mxu0 0.0
  %85 = vmatpush1.msra.mxu0 %v49
  %86 = vmatprep.subr.mxu0 0.0
  %87 = vmatpush1.msra.mxu0 %v50
  %88 = vmatprep.subr.mxu0 0.0
  %89 = vmatpush1.msra.mxu0 %v51
  %90 = vmatprep.subr.mxu0 0.0
  %91 = vmatpush1.msra.mxu0 %v52
  %92 = vmatprep.subr.mxu0 0.0
  %93 = vmatpush1.msra.mxu0 0.0
  %94 = vmatprep.subr.mxu0 0.0
  %95 = vmatpush1.msra.mxu0 0.0
  %96 = vmatprep.subr.mxu0 0.0
  %97 = vmatpush1.msra.mxu0 0.0
  %98 = vmatprep.subr.mxu0 0.0
  %99 = vmatpush1.msra.mxu0 0.0
  %100 = vmatprep.subr.mxu0 0.0
  %101 = vmatpush1.msra.mxu0 0.0
  %102 = vmatprep.subr.mxu0 0.0
  %103 = vmatpush1.msra.mxu0 0.0
  %104 = vmatprep.subr.mxu0 0.0
  %105 = vmatpush1.msra.mxu0 0.0
  %106 = vmatprep.subr.mxu0 0.0
  %107 = vmatpush1.msra.mxu0 0.0
  %108 = vmatprep.subr.mxu0 0.0
  %109 = vmatpush1.msra.mxu0 0.0
  %110 = vmatprep.subr.mxu0 0.0
  %111 = vmatpush1.msra.mxu0 0.0
  %112 = vmatprep.subr.mxu0 0.0
  %113 = vmatpush1.msra.mxu0 0.0
  %114 = vmatprep.subr.mxu0 0.0
  %115 = vmatpush1.msra.mxu0 0.0
  %116 = vmatprep.subr.mxu0 0.0
  %117 = vmatpush1.msra.mxu0 0.0
  %118 = vmatprep.subr.mxu0 0.0
  %119 = vmatpush1.msra.mxu0 0.0
  %120 = vmatprep.subr.mxu0 0.0
  %121 = vmatpush1.msra.mxu0 0.0
  %122 = vmatprep.subr.mxu0 0.0
  %123 = vmatpush1.msra.mxu0 0.0
  %124 = vmatprep.mubr.f32.mxu0 0.0
  %125 = vmatmul.mubr.f32.gmra.mrb[0].mxu0 %v36
  %v126 = vpop.f32.mrb[0].mxu0
  %v127 = vadd.f32 %v58, %v126
  %v128 = vpop.f32.mrb[0].mxu0
  %129 = vdwg.mxu0
  %v130 = vmax.f32 %v127, 0.0
  %v131 = vld [vmem:[%s4] sm:$0xff]
  %v132 = vld [vmem:[%s4 + $0x8] sm:$0xff]
  %v133 = vld [vmem:[%s4 + $0x10] sm:$0xff]
  %v134 = vld [vmem:[%s4 + $0x18] sm:$0xff]
  %v135 = vld [vmem:[%s4 + $0x20] sm:$0xff]
  %v136 = vld [vmem:[%s4 + $0x28] sm:$0xff]
  %v137 = vld [vmem:[%s4 + $0x30] sm:$0xff]
  %v138 = vld [vmem:[%s4 + $0x38] sm:$0xff]
  %v139 = vld [vmem:[%s4 + $0x40] sm:$0xff]
  %v140 = vld [vmem:[%s4 + $0x48] sm:$0xff]
  %v141 = vld [vmem:[%s4 + $0x50] sm:$0xff]
  %v142 = vld [vmem:[%s4 + $0x58] sm:$0xff]
  %v143 = vld [vmem:[%s4 + $0x60] sm:$0xff]
  %v144 = vld [vmem:[%s4 + $0x68] sm:$0xff]
  %v145 = vld [vmem:[%s4 + $0x70] sm:$0xff]
  %v146 = vld [vmem:[%s4 + $0x78] sm:$0xff]
  %v147 = vld [vmem:[%s5] sm:$0x1]
  %v149 = vlaneseq
  %v150 = vshrl.u32 %v149, 7
  %v151 = vsub.s32 0, %v150
  %v152 = vrot.slane %v147, %v151
  %154 = vmatprep.subr.mxu0 0.0
  %155 = vmatpush1.msra.mxu0 %v131
  %156 = vmatprep.subr.mxu0 0.0
  %157 = vmatpush1.msra.mxu0 %v132
  %158 = vmatprep.subr.mxu0 0.0
  %159 = vmatpush1.msra.mxu0 %v133
  %160 = vmatprep.subr.mxu0 0.0
  %161 = vmatpush1.msra.mxu0 %v134
  %162 = vmatprep.subr.mxu0 0.0
  %163 = vmatpush1.msra.mxu0 %v135
  %164 = vmatprep.subr.mxu0 0.0
  %165 = vmatpush1.msra.mxu0 %v136
  %166 = vmatprep.subr.mxu0 0.0
  %167 = vmatpush1.msra.mxu0 %v137
  %168 = vmatprep.subr.mxu0 0.0
  %169 = vmatpush1.msra.mxu0 %v138
  %170 = vmatprep.subr.mxu0 0.0
  %171 = vmatpush1.msra.mxu0 %v139
  %172 = vmatprep.subr.mxu0 0.0
  %173 = vmatpush1.msra.mxu0 %v140
  %174 = vmatprep.subr.mxu0 0.0
  %175 = vmatpush1.msra.mxu0 %v141
  %176 = vmatprep.subr.mxu0 0.0
  %177 = vmatpush1.msra.mxu0 %v142
  %178 = vmatprep.subr.mxu0 0.0
  %179 = vmatpush1.msra.mxu0 %v143
  %180 = vmatprep.subr.mxu0 0.0
  %181 = vmatpush1.msra.mxu0 %v144
  %182 = vmatprep.subr.mxu0 0.0
  %183 = vmatpush1.msra.mxu0 %v145
  %184 = vmatprep.subr.mxu0 0.0
  %185 = vmatpush1.msra.mxu0 %v146
  %186 = vmatprep.subr.mxu0 0.0
  %187 = vmatpush1.msra.mxu0 0.0
  %188 = vmatprep.subr.mxu0 0.0
  %189 = vmatpush1.msra.mxu0 0.0
  %190 = vmatprep.subr.mxu0 0.0
  %191 = vmatpush1.msra.mxu0 0.0
  %192 = vmatprep.subr.mxu0 0.0
  %193 = vmatpush1.msra.mxu0 0.0
  %194 = vmatprep.subr.mxu0 0.0
  %195 = vmatpush1.msra.mxu0 0.0
  %196 = vmatprep.subr.mxu0 0.0
  %197 = vmatpush1.msra.mxu0 0.0
  %198 = vmatprep.subr.mxu0 0.0
  %199 = vmatpush1.msra.mxu0 0.0
  %200 = vmatprep.subr.mxu0 0.0
  %201 = vmatpush1.msra.mxu0 0.0
  %202 = vmatprep.subr.mxu0 0.0
  %203 = vmatpush1.msra.mxu0 0.0
  %204 = vmatprep.subr.mxu0 0.0
  %205 = vmatpush1.msra.mxu0 0.0
  %206 = vmatprep.subr.mxu0 0.0
  %207 = vmatpush1.msra.mxu0 0.0
  %208 = vmatprep.subr.mxu0 0.0
  %209 = vmatpush1.msra.mxu0 0.0
  %210 = vmatprep.subr.mxu0 0.0
  %211 = vmatpush1.msra.mxu0 0.0
  %212 = vmatprep.subr.mxu0 0.0
  %213 = vmatpush1.msra.mxu0 0.0
  %214 = vmatprep.subr.mxu0 0.0
  %215 = vmatpush1.msra.mxu0 0.0
  %216 = vmatprep.subr.mxu0 0.0
  %217 = vmatpush1.msra.mxu0 0.0
  %218 = vmatprep.mubr.f32.mxu0 0.0
  %219 = vmatmul.mubr.f32.gmra.mrb[0].mxu0 %v130
  %v220 = vpop.f32.mrb[0].mxu0
  %v221 = vadd.f32 %v152, %v220
  %v222 = vpop.f32.mrb[0].mxu0
  %223 = vdwg.mxu0
  %v224 = vmax.f32 %v221, 0.0
  %v225 = vld [vmem:[%s6] sm:$0xff]
  %v226 = vld [vmem:[%s6 + $0x8] sm:$0xff]
  %v227 = vld [vmem:[%s6 + $0x10] sm:$0xff]
  %v228 = vld [vmem:[%s6 + $0x18] sm:$0xff]
  %v229 = vld [vmem:[%s6 + $0x20] sm:$0xff]
  %v230 = vld [vmem:[%s6 + $0x28] sm:$0xff]
  %v231 = vld [vmem:[%s6 + $0x30] sm:$0xff]
  %v232 = vld [vmem:[%s6 + $0x38] sm:$0xff]
  %v233 = vld [vmem:[%s6 + $0x40] sm:$0xff]
  %v234 = vld [vmem:[%s6 + $0x48] sm:$0xff]
  %v235 = vld [vmem:[%s6 + $0x50] sm:$0xff]
  %v236 = vld [vmem:[%s6 + $0x58] sm:$0xff]
  %v237 = vld [vmem:[%s6 + $0x60] sm:$0xff]
  %v238 = vld [vmem:[%s6 + $0x68] sm:$0xff]
  %v239 = vld [vmem:[%s6 + $0x70] sm:$0xff]
  %v240 = vld [vmem:[%s6 + $0x78] sm:$0xff]
  %v241 = vld [vmem:[%s7] sm:$0x1]
  %v243 = vlaneseq
  %v244 = vshrl.u32 %v243, 7
  %v245 = vsub.s32 0, %v244
  %v246 = vrot.slane %v241, %v245
  %248 = vmatprep.subr.mxu0 0.0
  %249 = vmatpush1.msra.mxu0 %v225
  %250 = vmatprep.subr.mxu0 0.0
  %251 = vmatpush1.msra.mxu0 %v226
  %252 = vmatprep.subr.mxu0 0.0
  %253 = vmatpush1.msra.mxu0 %v227
  %254 = vmatprep.subr.mxu0 0.0
  %255 = vmatpush1.msra.mxu0 %v228
  %256 = vmatprep.subr.mxu0 0.0
  %257 = vmatpush1.msra.mxu0 %v229
  %258 = vmatprep.subr.mxu0 0.0
  %259 = vmatpush1.msra.mxu0 %v230
  %260 = vmatprep.subr.mxu0 0.0
  %261 = vmatpush1.msra.mxu0 %v231
  %262 = vmatprep.subr.mxu0 0.0
  %263 = vmatpush1.msra.mxu0 %v232
  %264 = vmatprep.subr.mxu0 0.0
  %265 = vmatpush1.msra.mxu0 %v233
  %266 = vmatprep.subr.mxu0 0.0
  %267 = vmatpush1.msra.mxu0 %v234
  %268 = vmatprep.subr.mxu0 0.0
  %269 = vmatpush1.msra.mxu0 %v235
  %270 = vmatprep.subr.mxu0 0.0
  %271 = vmatpush1.msra.mxu0 %v236
  %272 = vmatprep.subr.mxu0 0.0
  %273 = vmatpush1.msra.mxu0 %v237
  %274 = vmatprep.subr.mxu0 0.0
  %275 = vmatpush1.msra.mxu0 %v238
  %276 = vmatprep.subr.mxu0 0.0
  %277 = vmatpush1.msra.mxu0 %v239
  %278 = vmatprep.subr.mxu0 0.0
  %279 = vmatpush1.msra.mxu0 %v240
  %280 = vmatprep.subr.mxu0 0.0
  %281 = vmatpush1.msra.mxu0 0.0
  %282 = vmatprep.subr.mxu0 0.0
  %283 = vmatpush1.msra.mxu0 0.0
  %284 = vmatprep.subr.mxu0 0.0
  %285 = vmatpush1.msra.mxu0 0.0
  %286 = vmatprep.subr.mxu0 0.0
  %287 = vmatpush1.msra.mxu0 0.0
  %288 = vmatprep.subr.mxu0 0.0
  %289 = vmatpush1.msra.mxu0 0.0
  %290 = vmatprep.subr.mxu0 0.0
  %291 = vmatpush1.msra.mxu0 0.0
  %292 = vmatprep.subr.mxu0 0.0
  %293 = vmatpush1.msra.mxu0 0.0
  %294 = vmatprep.subr.mxu0 0.0
  %295 = vmatpush1.msra.mxu0 0.0
  %296 = vmatprep.subr.mxu0 0.0
  %297 = vmatpush1.msra.mxu0 0.0
  %298 = vmatprep.subr.mxu0 0.0
  %299 = vmatpush1.msra.mxu0 0.0
  %300 = vmatprep.subr.mxu0 0.0
  %301 = vmatpush1.msra.mxu0 0.0
  %302 = vmatprep.subr.mxu0 0.0
  %303 = vmatpush1.msra.mxu0 0.0
  %304 = vmatprep.subr.mxu0 0.0
  %305 = vmatpush1.msra.mxu0 0.0
  %306 = vmatprep.subr.mxu0 0.0
  %307 = vmatpush1.msra.mxu0 0.0
  %308 = vmatprep.subr.mxu0 0.0
  %309 = vmatpush1.msra.mxu0 0.0
  %310 = vmatprep.subr.mxu0 0.0
  %311 = vmatpush1.msra.mxu0 0.0
  %312 = vmatprep.mubr.f32.mxu0 0.0
  %313 = vmatmul.mubr.f32.gmra.mrb[0].mxu0 %v224
  %v314 = vpop.f32.mrb[0].mxu0
  %v315 = vadd.f32 %v246, %v314
  %v316 = vpop.f32.mrb[0].mxu0
  %317 = vdwg.mxu0
  %v318 = vtanh.pop %v315
  %319 = vst [vmem:[%s8] sm:$0xff] %v318
  // Predicated region
  $region34: #{actor_forward.1} parent=0 // pred_check
    _
  $region35: #{actor_forward.1} parent=0 // pred_check_branch
    %321 = sbr.rel (0) target = $region37
  $region36: #{actor_forward.1} parent=0 // pred_region
    _
  $region37: #{actor_forward.1} parent=0 // pred_fallthru
    _
  // Predicated region
  $region38: #{actor_forward.1} parent=0 // pred_check
    _
  $region39: #{actor_forward.1} parent=0 // pred_check_branch
    %323 = sbr.rel (0) target = $region41
  $region40: #{actor_forward.1} parent=0 // pred_region
    _
  $region41: #{actor_forward.1} parent=0 // pred_fallthru
    _

</llo_original>
